<compile_context>
chip_gen: v7x
topology: tpu7x:2x2x1
jax: 0.10.0
libtpu: 0.0.40
codegen_flags: <defaults>
</compile_context>

<pallas_src>
import jax
import jax.numpy as jnp
from jax.experimental import pallas as pl
from jax.experimental.pallas import tpu as pltpu

_LANES = 128
_SUBLANES = 8


def _linreg_kernel(w_ref, b_ref, x_ref, y_ref, o_ref, loss_ref):
    # w_ref, b_ref: (1, 1) scalars in SMEM
    # x_ref, y_ref, o_ref, loss_ref: (TILE_M, 128) lane-dense tiles in VMEM
    w = w_ref[0, 0]
    b = b_ref[0, 0]
    o = x_ref[...] * w + b          # nn.Linear(1,1): o = x @ W^T + b, done on the VPU
    o_ref[...] = o
    d = o - y_ref[...]
    loss_ref[...] = d * d           # per-sample squared error (OutputRegression MSE)


def _cdiv(a, b):
    return -(-a // b)


def model_linear_regression_shell(x, y, weight, bias, *, tile_m=512):
    """x: [N, 1] f32, y: [N, 1] f32, weight: [1, 1], bias: [1].
    Returns (regression_output [N,1], per_sample_squared_error [N,1])."""
    n, _ = x.shape
    f_out = weight.shape[0]  # == 1

    # Lane-dense packing: flatten [N,1] -> [N], pad, view as [rows, 128].
    rows_needed = max(1, _cdiv(n, _LANES))
    rows_min = _cdiv(rows_needed, _SUBLANES) * _SUBLANES      # sublane-aligned
    tile = min(tile_m, rows_min)                              # multiple of 8
    rows = _cdiv(rows_min, tile) * tile                       # multiple of tile
    n_pad = rows * _LANES

    xf = jnp.pad(x.reshape(-1), (0, n_pad - n)).reshape(rows, _LANES)
    yf = jnp.pad(y.reshape(-1), (0, n_pad - n)).reshape(rows, _LANES)
    w2 = weight.reshape(1, 1).astype(jnp.float32)
    b2 = bias.reshape(1, 1).astype(jnp.float32)

    vspec = pl.BlockSpec((tile, _LANES), lambda i: (i, 0))
    sspec = pl.BlockSpec(memory_space=pltpu.MemorySpace.SMEM)

    o_pad, loss_pad = pl.pallas_call(
        _linreg_kernel,
        out_shape=(
            jax.ShapeDtypeStruct((rows, _LANES), jnp.float32),
            jax.ShapeDtypeStruct((rows, _LANES), jnp.float32),
        ),
        grid=(rows // tile,),
        in_specs=[sspec, sspec, vspec, vspec],
        out_specs=(vspec, vspec),
        compiler_params=pltpu.CompilerParams(
            dimension_semantics=("parallel",),
        ),
    )(w2, b2, xf, yf)

    # Strip padding; padded rows never leak into the returned [N, 1] results.
    o = o_pad.reshape(-1)[:n].reshape(n, f_out)
    loss = loss_pad.reshape(-1)[:n].reshape(n, f_out)
    return o, loss


if __name__ == "__main__":
    key = jax.random.PRNGKey(0)
    kx, ky = jax.random.split(key)

    N = 8
    x = jax.random.normal(kx, (N, 1), dtype=jnp.float32)
    y = jax.random.normal(ky, (N, 1), dtype=jnp.float32)

    # Deterministic parameters, exactly as the PyTorch __init__ fills them.
    weight = jnp.full((1, 1), 1.5, dtype=jnp.float32)
    bias = jnp.zeros((1,), dtype=jnp.float32)

    o, loss = model_linear_regression_shell(x, y, weight, bias)
    o = jax.block_until_ready(o)
    loss = jax.block_until_ready(loss)

    # Reference check: o == 1.5 * x + 0, loss == (o - y)^2
    o_ref = x * 1.5
    loss_ref = (o_ref - y) ** 2
    assert o.shape == (N, 1) and loss.shape == (N, 1)
    assert jnp.allclose(o, o_ref, atol=1e-6), "regression output mismatch"
    assert jnp.allclose(loss, loss_ref, atol=1e-6), "squared-error mismatch"

    # TODO(synk): trw.train.OutputRegression's reporting/metric bookkeeping has
    # no Pallas equivalent; only its prediction + per-sample MSE math is done here.
    print("KERNEL_OK")
</pallas_src>

<mosaic_0001>
module attributes {stable_mosaic.version = 11 : i64} {
  func.func @_linreg_kernel(%arg0: i32, %arg1: memref<1x1xf32, #tpu.memory_space<smem>>, %arg2: memref<1x1xf32, #tpu.memory_space<smem>>, %arg3: memref<8x128xf32, #tpu.memory_space<vmem>>, %arg4: memref<8x128xf32, #tpu.memory_space<vmem>>, %arg5: memref<8x128xf32, #tpu.memory_space<vmem>>, %arg6: memref<8x128xf32, #tpu.memory_space<vmem>>) attributes {dimension_semantics = [#tpu.dimension_semantics<parallel>], iteration_bounds = array<i64: 1>, scalar_prefetch = 0 : i64, scratch_operands = 0 : i64, tpu.core_type = #tpu.core_type<tc>, window_params = [{transform_indices = @transform_0, window_bounds = array<i64: 1, 1>}, {transform_indices = @transform_1, window_bounds = array<i64: 1, 1>}, {transform_indices = @transform_2, window_bounds = array<i64: 8, 128>}, {transform_indices = @transform_3, window_bounds = array<i64: 8, 128>}, {transform_indices = @transform_4, window_bounds = array<i64: 8, 128>}, {transform_indices = @transform_5, window_bounds = array<i64: 8, 128>}]} {
    %c0 = arith.constant 0 : index
    %c0_0 = arith.constant 0 : index
    %0 = memref.load %arg1[%c0, %c0_0] : memref<1x1xf32, #tpu.memory_space<smem>>
    %c0_1 = arith.constant 0 : index
    %c0_2 = arith.constant 0 : index
    %1 = memref.load %arg2[%c0_1, %c0_2] : memref<1x1xf32, #tpu.memory_space<smem>>
    %c0_3 = arith.constant 0 : index
    %c0_4 = arith.constant 0 : index
    %2 = vector.load %arg3[%c0_3, %c0_4] : memref<8x128xf32, #tpu.memory_space<vmem>>, vector<8x128xf32>
    %3 = vector.broadcast %0 : f32 to vector<8x128xf32>
    %4 = arith.mulf %2, %3 : vector<8x128xf32>
    %5 = vector.broadcast %1 : f32 to vector<8x128xf32>
    %6 = arith.addf %4, %5 : vector<8x128xf32>
    %c0_5 = arith.constant 0 : index
    %c0_6 = arith.constant 0 : index
    %7 = vector.load %arg5[%c0_5, %c0_6] : memref<8x128xf32, #tpu.memory_space<vmem>>, vector<8x128xf32>
    tpu.vector_store %arg5[%c0_5, %c0_6], %6 {strides = array<i32>} : memref<8x128xf32, #tpu.memory_space<vmem>>, vector<8x128xf32>,
    %c0_7 = arith.constant 0 : index
    %c0_8 = arith.constant 0 : index
    %8 = vector.load %arg4[%c0_7, %c0_8] : memref<8x128xf32, #tpu.memory_space<vmem>>, vector<8x128xf32>
    %9 = arith.subf %6, %8 : vector<8x128xf32>
    %10 = arith.mulf %9, %9 : vector<8x128xf32>
    %c0_9 = arith.constant 0 : index
    %c0_10 = arith.constant 0 : index
    %11 = vector.load %arg6[%c0_9, %c0_10] : memref<8x128xf32, #tpu.memory_space<vmem>>, vector<8x128xf32>
    tpu.vector_store %arg6[%c0_9, %c0_10], %10 {strides = array<i32>} : memref<8x128xf32, #tpu.memory_space<vmem>>, vector<8x128xf32>,
    return
  }
  func.func @transform_0(%arg0: i32) -> (i32, i32) {
    %c0_i32 = arith.constant 0 : i32
    %c0_i32_0 = arith.constant 0 : i32
    %c0_i32_1 = arith.constant 0 : i32
    return %c0_i32, %c0_i32_0 : i32, i32
  }
  func.func @transform_1(%arg0: i32) -> (i32, i32) {
    %c0_i32 = arith.constant 0 : i32
    %c0_i32_0 = arith.constant 0 : i32
    %c0_i32_1 = arith.constant 0 : i32
    return %c0_i32, %c0_i32_0 : i32, i32
  }
  func.func @transform_2(%arg0: i32) -> (i32, i32) {
    %c0_i32 = arith.constant 0 : i32
    %c0_i32_0 = arith.constant 0 : i32
    return %arg0, %c0_i32 : i32, i32
  }
  func.func @transform_3(%arg0: i32) -> (i32, i32) {
    %c0_i32 = arith.constant 0 : i32
    %c0_i32_0 = arith.constant 0 : i32
    return %arg0, %c0_i32 : i32, i32
  }
  func.func @transform_4(%arg0: i32) -> (i32, i32) {
    %c0_i32 = arith.constant 0 : i32
    %c0_i32_0 = arith.constant 0 : i32
    return %arg0, %c0_i32 : i32, i32
  }
  func.func @transform_5(%arg0: i32) -> (i32, i32) {
    %c0_i32 = arith.constant 0 : i32
    %c0_i32_0 = arith.constant 0 : i32
    return %arg0, %c0_i32 : i32, i32
  }
}

</mosaic_0001>

<llo_original>
// kernel: tpu_custom_call.1
$region0: #{tpu_custom_call.1}
  #allocation0 [shape = 'u32[]', space=smem, size = 0x4, offset = 0x4, fixed_abs, tag = 'smem constant byte address 0x4 - core index']
  #allocation1 [shape = 'u32[144,128]{1,0:T(1,128)}', space=vmem, size = 0x12000, scoped, tag = 'internal scratch']
  #allocation2 [shape = 'f32[1,1]{1,0:T(1,128)S(6)}', space=smem, size = 0x200, scoped, tag = 'scoped memory for tpu_custom_call.1']
  #allocation3 [shape = 'f32[1,1]{1,0:T(1,128)S(6)}', space=smem, size = 0x200, scoped, tag = 'scoped memory for tpu_custom_call.1']
  %s0 = inlined_call_operand.<no memory space> [shape: f32[1,1], index: 0, kind: input, shape index: {}]
  %s1 = inlined_call_operand.<no memory space> [shape: f32[1,1], index: 1, kind: input, shape index: {}]
  %s2 = inlined_call_operand.hbm [shape: f32[8,128], index: 2, kind: input, shape index: {}]
  %s3 = inlined_call_operand.vmem [shape: f32[8,128], index: 3, kind: input, shape index: {}]
  %s4 = inlined_call_operand.hbm [shape: f32[8,128], index: 4, kind: output, shape index: {0}]
  %s5 = inlined_call_operand.hbm [shape: f32[8,128], index: 5, kind: output, shape index: {1}]
  %6 = xla_tuple %s4, %s5
  %s7 = sld [smem:[#allocation0]]
  $region38: #{tpu_custom_call.1} parent=0
    _
  %s9 = ssub.s32 1, %s7
  %s10 = scalar_select 0, %s9, %s7
  %11 = sst [smem:[#allocation2]] %s0
  %12 = sst [smem:[#allocation3]] %s1
  $region1: #{tpu_custom_call.1} parent=0
    #allocation4 [shape = 'u8[4096]{0}', space=vmem, size = 0x1000, scoped, tag = 'input window, operand 2, single buffered']
    #allocation5 [shape = 's32[1]{0}', space=sflag, size = 0x4, scoped, tag = 'scoped memory for tpu_custom_call.1']
    #allocation6 [shape = 's32[1]{0}', space=sflag, size = 0x4, scoped, tag = 'scoped memory for tpu_custom_call.1']
    #allocation7 [shape = 'u8[4096]{0}', space=vmem, size = 0x1000, scoped, tag = 'output window, operand 0, single buffered']
    #allocation8 [shape = 'u8[4096]{0}', space=vmem, size = 0x1000, scoped, tag = 'output window, operand 1, single buffered']
    #allocation9 [shape = 's32[1]{0}', space=sflag, size = 0x4, scoped, tag = 'scoped memory for tpu_custom_call.1']
    %13 = vsyncpa [#allocation5], 0
    %14 = vsyncpa [#allocation6], 0
    %15 = vsyncpa [#allocation9], 0
    // Predicated region
    $region2: #{tpu_custom_call.1} parent=1 // pred_check
      _
    $region3: #{tpu_custom_call.1} parent=1 // pred_check_branch
      %17 = sbr.rel (0) target = $region5
    $region4: #{tpu_custom_call.1} parent=1 // pred_region
      _
    $region5: #{tpu_custom_call.1} parent=1 // pred_fallthru
      _
    // Predicated region
    $region6: #{tpu_custom_call.1} parent=1 // pred_check
      _
    $region7: #{tpu_custom_call.1} parent=1 // pred_check_branch
      %19 = sbr.rel (0) target = $region9
    $region8: #{tpu_custom_call.1} parent=1 // pred_region
      _
    $region9: #{tpu_custom_call.1} parent=1 // pred_fallthru
      _
    // Predicated region
    $region10: #{tpu_custom_call.1} parent=1 // pred_check
      _
    $region11: #{tpu_custom_call.1} parent=1 // pred_check_branch
      %21 = sbr.rel (0) target = $region13
    $region12: #{tpu_custom_call.1} parent=1 // pred_region
      %s23 = ssub.s32 128, 128
      %24 = vsyncadd [#allocation5], %s23
      %s26 = sshll.u32 [#allocation4], 4
      %s27 = int_to_ptr.vmem [resolvable:$true] %s26
      %29 = dma.hbm_to_vmem [thread:$0]  %s2, 128, %s27, [#allocation5]
    $region13: #{tpu_custom_call.1} parent=1 // pred_fallthru
      _
    // Predicated region
    $region14: #{tpu_custom_call.1} parent=1 // pred_check
      _
    $region15: #{tpu_custom_call.1} parent=1 // pred_check_branch
      %31 = sbr.rel (0) target = $region17
    $region16: #{tpu_custom_call.1} parent=1 // pred_region
      _
    $region17: #{tpu_custom_call.1} parent=1 // pred_fallthru
      _
    // Predicated region
    $region18: #{tpu_custom_call.1} parent=1 // pred_check
      _
    $region19: #{tpu_custom_call.1} parent=1 // pred_check_branch
      %33 = sbr.rel (0) target = $region21
    $region20: #{tpu_custom_call.1} parent=1 // pred_region
      %34 = dma.done [#allocation5], 128
    $region21: #{tpu_custom_call.1} parent=1 // pred_fallthru
      _
    %s35 = sld [smem:[#allocation2]]
    %s36 = sld [smem:[#allocation3]]
    %v37 = vld [vmem:[#allocation4] sm:$0xff]
    %v38 = vstv %s35
    %v39 = vmul.f32 %v37, %v38
    %v40 = vstv %s36
    %v41 = vadd.f32 %v39, %v40
    %42 = vst [vmem:[#allocation7] sm:$0xff] %v41
    %v43 = vld [vmem:[%s3] sm:$0xff]
    %v44 = vsub.f32 %v41, %v43
    %v45 = vmul.f32 %v44, %v44
    %46 = vst [vmem:[#allocation8] sm:$0xff] %v45
    // Predicated region
    $region22: #{tpu_custom_call.1} parent=1 // pred_check
      _
    $region23: #{tpu_custom_call.1} parent=1 // pred_check_branch
      %48 = sbr.rel (0) target = $region25
    $region24: #{tpu_custom_call.1} parent=1 // pred_region
      %s50 = ssub.s32 128, 128
      %51 = vsyncadd [#allocation6], %s50
      %s53 = sshll.u32 [#allocation7], 4
      %s54 = int_to_ptr.vmem [resolvable:$true] %s53
      %56 = dma.vmem_to_hbm [thread:$0]  %s54, 128, %s4, [#allocation6]
    $region25: #{tpu_custom_call.1} parent=1 // pred_fallthru
      _
    // Predicated region
    $region26: #{tpu_custom_call.1} parent=1 // pred_check
      _
    $region27: #{tpu_custom_call.1} parent=1 // pred_check_branch
      %58 = sbr.rel (0) target = $region29
    $region28: #{tpu_custom_call.1} parent=1 // pred_region
      %s60 = ssub.s32 128, 128
      %61 = vsyncadd [#allocation9], %s60
      %s63 = sshll.u32 [#allocation8], 4
      %s64 = int_to_ptr.vmem [resolvable:$true] %s63
      %66 = dma.vmem_to_hbm [thread:$0]  %s64, 128, %s5, [#allocation9]
    $region29: #{tpu_custom_call.1} parent=1 // pred_fallthru
      _
    // Predicated region
    $region30: #{tpu_custom_call.1} parent=1 // pred_check
      _
    $region31: #{tpu_custom_call.1} parent=1 // pred_check_branch
      %68 = sbr.rel (0) target = $region33
    $region32: #{tpu_custom_call.1} parent=1 // pred_region
      %69 = dma.done [#allocation6], 128
    $region33: #{tpu_custom_call.1} parent=1 // pred_fallthru
      _
    // Predicated region
    $region34: #{tpu_custom_call.1} parent=1 // pred_check
      _
    $region35: #{tpu_custom_call.1} parent=1 // pred_check_branch
      %71 = sbr.rel (0) target = $region37
    $region36: #{tpu_custom_call.1} parent=1 // pred_region
      %72 = dma.done [#allocation9], 128
    $region37: #{tpu_custom_call.1} parent=1 // pred_fallthru
      _
    %73 = vsyncpa [#allocation5], 1
    %74 = vsyncpa [#allocation6], 1
    %75 = vsyncpa [#allocation9], 1

</llo_original>
